<compile_context>
chip_gen: v7x
topology: tpu7x:2x2x1
jax: 0.10.0
libtpu: 0.0.40
codegen_flags: <defaults>
</compile_context>

<pallas_src>
from functools import partial

import jax
import jax.numpy as jnp
from jax import lax
from jax.experimental import pallas as pl
from jax.experimental.pallas import tpu as pltpu

KH = KW = 3
EPS = 1e-5
LANES = 128
SUBLANES = 8


def _round_up(v, m):
    return (v + m - 1) // m * m


def _conv_stats_kernel(x_ref, w_ref, conv_ref, psum_ref, psumsq_ref, *,
                       cin, img_pack, w_img, ho, wo, p_out):
    """Pass 1: direct 3x3 valid conv (Cout=1) + per-band partial BN statistics.

    x_ref:    (img_pack*cin, P_IN)  one sublane-packed image group, flat planes on lanes
    w_ref:    (img_pack*cin, 9)     per-sublane-row tap weights (resident)
    conv_ref: (img_pack, P_OUT)     conv output planes (lane-dense)
    psum_ref / psumsq_ref: (8, 128) per-band partial sum / sum-of-squares (replicated)
    """
    xv = x_ref[...]
    wv = w_ref[...]
    rows = img_pack * cin

    # Three coarse row-shifted windows (ky * W), each shared by the three kx taps.
    wins = [xv[:, ky * w_img: ky * w_img + p_out + (KW - 1)] for ky in range(KH)]

    acc = None
    for kx in range(KW):
        a = None
        for ky in range(KH):
            k = ky * KW + kx
            term = wins[ky] * wv[:, k:k + 1]          # per-sublane-row weight broadcast
            a = term if a is None else a + term
        fine = a[:, kx:kx + p_out]                     # fine kx shift of the accumulator
        acc = fine if acc is None else acc + fine      # (rows, P_OUT)

    # Channel reduction within each packed image (Cin sublane rows -> 1 row).
    per_img = [jnp.sum(acc[i * cin:(i + 1) * cin, :], axis=0, keepdims=True)
               for i in range(img_pack)]
    conv = per_img[0] if img_pack == 1 else jnp.concatenate(per_img, axis=0)
    conv_ref[...] = conv                               # (img_pack, P_OUT), wide unmasked store

    # Valid-pixel mask generated in-kernel from iota (no HBM mask stream).
    idx = lax.broadcasted_iota(jnp.int32, (img_pack, p_out), 1)
    if w_img & (w_img - 1) == 0:                       # power-of-two W -> pure bit ops
        yy = jnp.right_shift(idx, w_img.bit_length() - 1)
        xx = jnp.bitwise_and(idx, w_img - 1)
    else:
        yy = idx // w_img
        xx = idx - yy * w_img
    valid = (yy < ho) & (xx < wo)
    cm = jnp.where(valid, conv, 0.0)

    # Partial stats, replicated over a full (8,128) tile so the writeback is a plain
    # full-tile store; pass 2 folds the 8*128 replication factor into its constant.
    psum_ref[...] = jnp.full((SUBLANES, LANES), jnp.sum(cm), jnp.float32)
    psumsq_ref[...] = jnp.full((SUBLANES, LANES), jnp.sum(cm * cm), jnp.float32)


def _bn_relu_kernel(conv_ref, psum_ref, psumsq_ref, gamma_ref, beta_ref, o_ref, *,
                    inv_cnt):
    """Pass 2: BatchNorm2d(1) (training-mode biased batch stats) + ReLU per band."""
    conv = conv_ref[...]                               # (img_pack, P_OUT)
    mean = jnp.sum(psum_ref[...]) * inv_cnt            # tiny resident stats arrays
    ex2 = jnp.sum(psumsq_ref[...]) * inv_cnt
    var = jnp.maximum(ex2 - mean * mean, 0.0)          # clamp single-pass variance
    scale = lax.rsqrt(var + EPS) * gamma_ref[0]
    shift = beta_ref[0] - mean * scale
    o_ref[...] = jnp.maximum(conv * scale + shift, 0.0)


@jax.jit
def rnn_encoder2(x, w, b, gamma, beta):
    """x: (N, Cin, H, W); w: (1, Cin, 3, 3); b, gamma, beta: (1,). Returns (N, 1, Ho, Wo)."""
    n, cin, h, wdt = x.shape
    assert w.shape[0] == 1, "BatchNorm2d(1) in the reference module requires hidden_size == 1"
    ho, wo = h - KH + 1, wdt - KW + 1
    hw = h * wdt
    p_out = _round_up(hw, LANES)                       # lane-dense conv/output plane width
    s_max = (KH - 1) * wdt + (KW - 1)                  # largest flat tap offset
    p_in = _round_up(p_out + s_max, LANES)             # per-plane halo so windows stay in-bounds
    img_pack = max(1, SUBLANES // cin)                 # fill the 8 sublanes of every vreg
    n_pad = _round_up(n, img_pack)
    nb = n_pad // img_pack
    rows = img_pack * cin

    # Layout plumbing (jitted with everything else): no transpose, one pad, reshapes.
    xf = x.astype(jnp.float32).reshape(n, cin, hw)
    if (n_pad - n) or (p_in - hw):
        xf = jnp.pad(xf, ((0, n_pad - n), (0, 0), (0, p_in - hw)))
    x_bands = xf.reshape(nb, rows, p_in)

    w_rows = jnp.tile(w.reshape(cin, KH * KW).astype(jnp.float32), (img_pack, 1))
    # Conv bias is mathematically cancelled by the BatchNorm mean subtraction and does
    # not affect the variance, ReLU or output, so it is not used in the kernels.
    del b

    count = n * ho * wo
    inv_cnt = 1.0 / (float(count) * float(SUBLANES * LANES))

    # VMEM budget from the actual double-buffered blocks, with headroom; capped well
    # under v7x's 64 MiB physical VMEM (bands stay valid across v5e/v6e/v7x).
    band_bytes = 4 * (rows * p_in + img_pack * p_out + 2 * SUBLANES * LANES)
    vmem_limit = int(min(48 * 1024 * 1024, max(16 * 1024 * 1024, 4 * band_bytes + (1 << 20))))
    cparams = pltpu.CompilerParams(
        dimension_semantics=("parallel",),             # bands are independent -> megacore on v7x
        vmem_limit_bytes=vmem_limit)

    # Pass 1: conv + per-band partial statistics.
    conv_bands, psum, psumsq = pl.pallas_call(
        partial(_conv_stats_kernel, cin=cin, img_pack=img_pack, w_img=wdt,
                ho=ho, wo=wo, p_out=p_out),
        grid=(nb,),
        in_specs=[
            pl.BlockSpec((None, rows, p_in), lambda j: (j, 0, 0)),   # x band
            pl.BlockSpec((rows, KH * KW), lambda j: (0, 0)),         # weights, resident
        ],
        out_specs=[
            pl.BlockSpec((None, img_pack, p_out), lambda j: (j, 0, 0)),
            pl.BlockSpec((SUBLANES, LANES), lambda j: (j, 0)),
            pl.BlockSpec((SUBLANES, LANES), lambda j: (j, 0)),
        ],
        out_shape=(
            jax.ShapeDtypeStruct((nb, img_pack, p_out), jnp.float32),
            jax.ShapeDtypeStruct((nb * SUBLANES, LANES), jnp.float32),
            jax.ShapeDtypeStruct((nb * SUBLANES, LANES), jnp.float32),
        ),
        compiler_params=cparams,
        cost_estimate=pl.CostEstimate(
            flops=2 * n_pad * cin * KH * KW * p_out,
            transcendentals=0,
            bytes_accessed=4 * (nb * rows * p_in + nb * img_pack * p_out
                                + 2 * nb * SUBLANES * LANES)),
    )(x_bands, w_rows)

    # Pass 2: global-stat BatchNorm + ReLU.
    out_bands = pl.pallas_call(
        partial(_bn_relu_kernel, inv_cnt=inv_cnt),
        grid=(nb,),
        in_specs=[
            pl.BlockSpec((None, img_pack, p_out), lambda j: (j, 0, 0)),  # conv band
            pl.BlockSpec((nb * SUBLANES, LANES), lambda j: (0, 0)),      # partial sums (resident)
            pl.BlockSpec((nb * SUBLANES, LANES), lambda j: (0, 0)),      # partial sumsq (resident)
            pl.BlockSpec(memory_space=pltpu.MemorySpace.SMEM),           # gamma
            pl.BlockSpec(memory_space=pltpu.MemorySpace.SMEM),           # beta
        ],
        out_specs=pl.BlockSpec((None, img_pack, p_out), lambda j: (j, 0, 0)),
        out_shape=jax.ShapeDtypeStruct((nb, img_pack, p_out), jnp.float32),
        compiler_params=cparams,
        cost_estimate=pl.CostEstimate(
            flops=3 * nb * img_pack * p_out,
            transcendentals=nb,
            bytes_accessed=4 * (2 * nb * img_pack * p_out + 2 * nb * SUBLANES * LANES)),
    )(conv_bands, psum, psumsq, gamma.astype(jnp.float32), beta.astype(jnp.float32))

    y = out_bands.reshape(n_pad, p_out)[:n, :hw].reshape(n, h, wdt)[:, :ho, :wo]
    return y.reshape(n, 1, ho, wo)


if __name__ == "__main__":
    key = jax.random.PRNGKey(0)
    # N=4 exercises both the multi-band grid (2 bands) and the 2-images-per-band
    # sublane packing at Cin=4.
    N, Cin, H, W = 4, 4, 16, 16
    hidden_size = 1  # required by BatchNorm2d(1) in the original module

    k1, k2, k3 = jax.random.split(key, 3)
    x = jax.random.normal(k1, (N, Cin, H, W), jnp.float32)

    # PyTorch Conv2d default init: U(-1/sqrt(fan_in), 1/sqrt(fan_in)).
    fan_in = Cin * KH * KW
    bound = 1.0 / (fan_in ** 0.5)
    w = jax.random.uniform(k2, (hidden_size, Cin, KH, KW), jnp.float32, -bound, bound)
    b = jax.random.uniform(k3, (hidden_size,), jnp.float32, -bound, bound)
    gamma = jnp.ones((1,), jnp.float32)   # BatchNorm2d default affine init
    beta = jnp.zeros((1,), jnp.float32)

    out = jax.block_until_ready(rnn_encoder2(x, w, b, gamma, beta))
    assert out.shape == (N, hidden_size, H - 2, W - 2)

    # Pure-JAX reference of the exact forward semantics (conv+bias -> train-mode BN -> ReLU).
    conv = lax.conv_general_dilated(
        x, w, window_strides=(1, 1), padding="VALID",
        dimension_numbers=("NCHW", "OIHW", "NCHW")) + b.reshape(1, -1, 1, 1)
    mean = conv.mean()
    var = ((conv - mean) ** 2).mean()
    ref = jnp.maximum((conv - mean) * lax.rsqrt(var + EPS) * gamma[0] + beta[0], 0.0)
    assert jnp.allclose(out, ref, atol=2e-4, rtol=2e-4), "mismatch vs JAX reference"

    print("KERNEL_OK")
</pallas_src>

<mosaic_0001>
module attributes {stable_mosaic.version = 11 : i64} {
  func.func @_conv_stats_kernel(%arg0: i32, %arg1: memref<1x8x384xf32, #tpu.memory_space<vmem>>, %arg2: memref<8x9xf32, #tpu.memory_space<vmem>>, %arg3: memref<1x2x256xf32, #tpu.memory_space<vmem>>, %arg4: memref<8x128xf32, #tpu.memory_space<vmem>>, %arg5: memref<8x128xf32, #tpu.memory_space<vmem>>) attributes {dimension_semantics = [#tpu.dimension_semantics<parallel>], iteration_bounds = array<i64: 2>, scalar_prefetch = 0 : i64, scratch_operands = 0 : i64, tpu.core_type = #tpu.core_type<tc>, window_params = [{transform_indices = @transform_0, window_bounds = array<i64: 1, 8, 384>}, {pipeline_mode = #tpu.pipeline_mode<synchronous>, transform_indices = @transform_1, window_bounds = array<i64: 8, 9>}, {transform_indices = @transform_2, window_bounds = array<i64: 1, 2, 256>}, {transform_indices = @transform_3, window_bounds = array<i64: 8, 128>}, {transform_indices = @transform_4, window_bounds = array<i64: 8, 128>}]} {
    %c0 = arith.constant 0 : index
    %c0_0 = arith.constant 0 : index
    %c0_1 = arith.constant 0 : index
    %0 = vector.load %arg1[%c0, %c0_0, %c0_1] : memref<1x8x384xf32, #tpu.memory_space<vmem>>, vector<1x8x384xf32>
    %1 = vector.shape_cast %0 : vector<1x8x384xf32> to vector<8x384xf32>
    %c0_2 = arith.constant 0 : index
    %c0_3 = arith.constant 0 : index
    %2 = vector.load %arg2[%c0_2, %c0_3] : memref<8x9xf32, #tpu.memory_space<vmem>>, vector<8x9xf32>
    %3 = vector.extract_strided_slice %1 {offsets = [0, 0], sizes = [8, 258], strides = [1, 1]} : vector<8x384xf32> to vector<8x258xf32>
    %4 = vector.extract_strided_slice %1 {offsets = [0, 16], sizes = [8, 258], strides = [1, 1]} : vector<8x384xf32> to vector<8x258xf32>
    %5 = vector.extract_strided_slice %1 {offsets = [0, 32], sizes = [8, 258], strides = [1, 1]} : vector<8x384xf32> to vector<8x258xf32>
    %6 = vector.extract_strided_slice %2 {offsets = [0, 0], sizes = [8, 1], strides = [1, 1]} : vector<8x9xf32> to vector<8x1xf32>
    %7 = vector.broadcast %6 : vector<8x1xf32> to vector<8x258xf32>
    %8 = arith.mulf %3, %7 : vector<8x258xf32>
    %9 = vector.extract_strided_slice %2 {offsets = [0, 3], sizes = [8, 1], strides = [1, 1]} : vector<8x9xf32> to vector<8x1xf32>
    %10 = vector.broadcast %9 : vector<8x1xf32> to vector<8x258xf32>
    %11 = arith.mulf %4, %10 : vector<8x258xf32>
    %12 = arith.addf %8, %11 : vector<8x258xf32>
    %13 = vector.extract_strided_slice %2 {offsets = [0, 6], sizes = [8, 1], strides = [1, 1]} : vector<8x9xf32> to vector<8x1xf32>
    %14 = vector.broadcast %13 : vector<8x1xf32> to vector<8x258xf32>
    %15 = arith.mulf %5, %14 : vector<8x258xf32>
    %16 = arith.addf %12, %15 : vector<8x258xf32>
    %17 = vector.extract_strided_slice %16 {offsets = [0, 0], sizes = [8, 256], strides = [1, 1]} : vector<8x258xf32> to vector<8x256xf32>
    %18 = vector.extract_strided_slice %2 {offsets = [0, 1], sizes = [8, 1], strides = [1, 1]} : vector<8x9xf32> to vector<8x1xf32>
    %19 = vector.broadcast %18 : vector<8x1xf32> to vector<8x258xf32>
    %20 = arith.mulf %3, %19 : vector<8x258xf32>
    %21 = vector.extract_strided_slice %2 {offsets = [0, 4], sizes = [8, 1], strides = [1, 1]} : vector<8x9xf32> to vector<8x1xf32>
    %22 = vector.broadcast %21 : vector<8x1xf32> to vector<8x258xf32>
    %23 = arith.mulf %4, %22 : vector<8x258xf32>
    %24 = arith.addf %20, %23 : vector<8x258xf32>
    %25 = vector.extract_strided_slice %2 {offsets = [0, 7], sizes = [8, 1], strides = [1, 1]} : vector<8x9xf32> to vector<8x1xf32>
    %26 = vector.broadcast %25 : vector<8x1xf32> to vector<8x258xf32>
    %27 = arith.mulf %5, %26 : vector<8x258xf32>
    %28 = arith.addf %24, %27 : vector<8x258xf32>
    %29 = vector.extract_strided_slice %28 {offsets = [0, 1], sizes = [8, 256], strides = [1, 1]} : vector<8x258xf32> to vector<8x256xf32>
    %30 = arith.addf %17, %29 : vector<8x256xf32>
    %31 = vector.extract_strided_slice %2 {offsets = [0, 2], sizes = [8, 1], strides = [1, 1]} : vector<8x9xf32> to vector<8x1xf32>
    %32 = vector.broadcast %31 : vector<8x1xf32> to vector<8x258xf32>
    %33 = arith.mulf %3, %32 : vector<8x258xf32>
    %34 = vector.extract_strided_slice %2 {offsets = [0, 5], sizes = [8, 1], strides = [1, 1]} : vector<8x9xf32> to vector<8x1xf32>
    %35 = vector.broadcast %34 : vector<8x1xf32> to vector<8x258xf32>
    %36 = arith.mulf %4, %35 : vector<8x258xf32>
    %37 = arith.addf %33, %36 : vector<8x258xf32>
    %38 = vector.extract_strided_slice %2 {offsets = [0, 8], sizes = [8, 1], strides = [1, 1]} : vector<8x9xf32> to vector<8x1xf32>
    %39 = vector.broadcast %38 : vector<8x1xf32> to vector<8x258xf32>
    %40 = arith.mulf %5, %39 : vector<8x258xf32>
    %41 = arith.addf %37, %40 : vector<8x258xf32>
    %42 = vector.extract_strided_slice %41 {offsets = [0, 2], sizes = [8, 256], strides = [1, 1]} : vector<8x258xf32> to vector<8x256xf32>
    %43 = arith.addf %30, %42 : vector<8x256xf32>
    %44 = vector.extract_strided_slice %43 {offsets = [0, 0], sizes = [4, 256], strides = [1, 1]} : vector<8x256xf32> to vector<4x256xf32>
    %cst = arith.constant dense<0.000000e+00> : vector<256xf32>
    %45 = vector.multi_reduction <add>, %44, %cst [0] : vector<4x256xf32> to vector<256xf32>
    %46 = vector.shape_cast %45 : vector<256xf32> to vector<1x256xf32>
    %47 = vector.extract_strided_slice %43 {offsets = [4, 0], sizes = [4, 256], strides = [1, 1]} : vector<8x256xf32> to vector<4x256xf32>
    %cst_4 = arith.constant dense<0.000000e+00> : vector<256xf32>
    %48 = vector.multi_reduction <add>, %47, %cst_4 [0] : vector<4x256xf32> to vector<256xf32>
    %49 = vector.shape_cast %48 : vector<256xf32> to vector<1x256xf32>
    %50 = tpu.concatenate %46, %49 in 0 : vector<1x256xf32>, vector<1x256xf32> -> vector<2x256xf32>
    %c0_5 = arith.constant 0 : index
    %c0_6 = arith.constant 0 : index
    %c0_7 = arith.constant 0 : index
    %51 = vector.load %arg3[%c0_5, %c0_6, %c0_7] : memref<1x2x256xf32, #tpu.memory_space<vmem>>, vector<1x2x256xf32>
    %52 = vector.shape_cast %51 : vector<1x2x256xf32> to vector<2x256xf32>
    %53 = vector.shape_cast %50 : vector<2x256xf32> to vector<1x2x256xf32>
    tpu.vector_store %arg3[%c0_5, %c0_6, %c0_7], %53 {strides = array<i32>} : memref<1x2x256xf32, #tpu.memory_space<vmem>>, vector<1x2x256xf32>,
    %54 = tpu.iota {dimensions = array<i32: 1>} : vector<2x256xi32>
    %c4_i32 = arith.constant 4 : i32
    %55 = vector.broadcast %c4_i32 : i32 to vector<2x256xi32>
    %56 = arith.shrsi %54, %55 : vector<2x256xi32>
    %c15_i32 = arith.constant 15 : i32
    %57 = vector.broadcast %c15_i32 : i32 to vector<2x256xi32>
    %58 = arith.andi %54, %57 : vector<2x256xi32>
    %c14_i32 = arith.constant 14 : i32
    %59 = vector.broadcast %c14_i32 : i32 to vector<2x256xi32>
    %60 = arith.cmpi slt, %56, %59 : vector<2x256xi32>
    %c14_i32_8 = arith.constant 14 : i32
    %61 = vector.broadcast %c14_i32_8 : i32 to vector<2x256xi32>
    %62 = arith.cmpi slt, %58, %61 : vector<2x256xi32>
    %63 = arith.andi %60, %62 : vector<2x256xi1>
    %cst_9 = arith.constant 0.000000e+00 : f32
    %64 = vector.broadcast %cst_9 : f32 to vector<2x256xf32>
    %65 = arith.select %63, %50, %64 : vector<2x256xi1>, vector<2x256xf32>
    %66 = vector.shape_cast %65 : vector<2x256xf32> to vector<1x2x256xf32>
    %cst_10 = arith.constant dense<0.000000e+00> : vector<1xf32>
    %67 = vector.multi_reduction <add>, %66, %cst_10 [1, 2] : vector<1x2x256xf32> to vector<1xf32>
    %68 = vector.shape_cast %67 : vector<1xf32> to vector<1x1x1xf32>
    %69 = vector.extract %68[0, 0, 0] : f32 from vector<1x1x1xf32>
    %70 = vector.broadcast %69 : f32 to vector<8x128xf32>
    %c0_11 = arith.constant 0 : index
    %c0_12 = arith.constant 0 : index
    %71 = vector.load %arg4[%c0_11, %c0_12] : memref<8x128xf32, #tpu.memory_space<vmem>>, vector<8x128xf32>
    tpu.vector_store %arg4[%c0_11, %c0_12], %70 {strides = array<i32>} : memref<8x128xf32, #tpu.memory_space<vmem>>, vector<8x128xf32>,
    %72 = arith.mulf %65, %65 : vector<2x256xf32>
    %73 = vector.shape_cast %72 : vector<2x256xf32> to vector<1x2x256xf32>
    %cst_13 = arith.constant dense<0.000000e+00> : vector<1xf32>
    %74 = vector.multi_reduction <add>, %73, %cst_13 [1, 2] : vector<1x2x256xf32> to vector<1xf32>
    %75 = vector.shape_cast %74 : vector<1xf32> to vector<1x1x1xf32>
    %76 = vector.extract %75[0, 0, 0] : f32 from vector<1x1x1xf32>
    %77 = vector.broadcast %76 : f32 to vector<8x128xf32>
    %c0_14 = arith.constant 0 : index
    %c0_15 = arith.constant 0 : index
    %78 = vector.load %arg5[%c0_14, %c0_15] : memref<8x128xf32, #tpu.memory_space<vmem>>, vector<8x128xf32>
    tpu.vector_store %arg5[%c0_14, %c0_15], %77 {strides = array<i32>} : memref<8x128xf32, #tpu.memory_space<vmem>>, vector<8x128xf32>,
    return
  }
  func.func @transform_0(%arg0: i32) -> (i32, i32, i32) {
    %c0_i32 = arith.constant 0 : i32
    %c0_i32_0 = arith.constant 0 : i32
    %c0_i32_1 = arith.constant 0 : i32
    return %arg0, %c0_i32, %c0_i32_0 : i32, i32, i32
  }
  func.func @transform_1(%arg0: i32) -> (i32, i32) {
    %c0_i32 = arith.constant 0 : i32
    %c0_i32_0 = arith.constant 0 : i32
    %c0_i32_1 = arith.constant 0 : i32
    return %c0_i32, %c0_i32_0 : i32, i32
  }
  func.func @transform_2(%arg0: i32) -> (i32, i32, i32) {
    %c0_i32 = arith.constant 0 : i32
    %c0_i32_0 = arith.constant 0 : i32
    %c0_i32_1 = arith.constant 0 : i32
    return %arg0, %c0_i32, %c0_i32_0 : i32, i32, i32
  }
  func.func @transform_3(%arg0: i32) -> (i32, i32) {
    %c0_i32 = arith.constant 0 : i32
    %c0_i32_0 = arith.constant 0 : i32
    return %arg0, %c0_i32 : i32, i32
  }
  func.func @transform_4(%arg0: i32) -> (i32, i32) {
    %c0_i32 = arith.constant 0 : i32
    %c0_i32_0 = arith.constant 0 : i32
    return %arg0, %c0_i32 : i32, i32
  }
}

module attributes {stable_mosaic.version = 11 : i64} {
  func.func @_bn_relu_kernel(%arg0: i32, %arg1: memref<1x2x256xf32, #tpu.memory_space<vmem>>, %arg2: memref<16x128xf32, #tpu.memory_space<vmem>>, %arg3: memref<16x128xf32, #tpu.memory_space<vmem>>, %arg4: memref<1xf32, #tpu.memory_space<smem>>, %arg5: memref<1xf32, #tpu.memory_space<smem>>, %arg6: memref<1x2x256xf32, #tpu.memory_space<vmem>>) attributes {dimension_semantics = [#tpu.dimension_semantics<parallel>], iteration_bounds = array<i64: 2>, scalar_prefetch = 0 : i64, scratch_operands = 0 : i64, tpu.core_type = #tpu.core_type<tc>, window_params = [{transform_indices = @transform_0, window_bounds = array<i64: 1, 2, 256>}, {pipeline_mode = #tpu.pipeline_mode<synchronous>, transform_indices = @transform_1, window_bounds = array<i64: 16, 128>}, {pipeline_mode = #tpu.pipeline_mode<synchronous>, transform_indices = @transform_2, window_bounds = array<i64: 16, 128>}, {transform_indices = @transform_3, window_bounds = array<i64: 1>}, {transform_indices = @transform_4, window_bounds = array<i64: 1>}, {transform_indices = @transform_5, window_bounds = array<i64: 1, 2, 256>}]} {
    %c0 = arith.constant 0 : index
    %c0_0 = arith.constant 0 : index
    %c0_1 = arith.constant 0 : index
    %0 = vector.load %arg1[%c0, %c0_0, %c0_1] : memref<1x2x256xf32, #tpu.memory_space<vmem>>, vector<1x2x256xf32>
    %1 = vector.shape_cast %0 : vector<1x2x256xf32> to vector<2x256xf32>
    %c0_2 = arith.constant 0 : index
    %c0_3 = arith.constant 0 : index
    %2 = vector.load %arg2[%c0_2, %c0_3] : memref<16x128xf32, #tpu.memory_space<vmem>>, vector<16x128xf32>
    %3 = vector.shape_cast %2 : vector<16x128xf32> to vector<1x16x128xf32>
    %cst = arith.constant dense<0.000000e+00> : vector<1xf32>
    %4 = vector.multi_reduction <add>, %3, %cst [1, 2] : vector<1x16x128xf32> to vector<1xf32>
    %5 = vector.shape_cast %4 : vector<1xf32> to vector<1x1x1xf32>
    %6 = vector.extract %5[0, 0, 0] : f32 from vector<1x1x1xf32>
    %cst_4 = arith.constant 1.24561541E-6 : f32
    %7 = arith.mulf %6, %cst_4 : f32
    %c0_5 = arith.constant 0 : index
    %c0_6 = arith.constant 0 : index
    %8 = vector.load %arg3[%c0_5, %c0_6] : memref<16x128xf32, #tpu.memory_space<vmem>>, vector<16x128xf32>
    %9 = vector.shape_cast %8 : vector<16x128xf32> to vector<1x16x128xf32>
    %cst_7 = arith.constant dense<0.000000e+00> : vector<1xf32>
    %10 = vector.multi_reduction <add>, %9, %cst_7 [1, 2] : vector<1x16x128xf32> to vector<1xf32>
    %11 = vector.shape_cast %10 : vector<1xf32> to vector<1x1x1xf32>
    %12 = vector.extract %11[0, 0, 0] : f32 from vector<1x1x1xf32>
    %cst_8 = arith.constant 1.24561541E-6 : f32
    %13 = arith.mulf %12, %cst_8 : f32
    %14 = arith.mulf %7, %7 : f32
    %15 = arith.subf %13, %14 : f32
    %cst_9 = arith.constant 0.000000e+00 : f32
    %16 = arith.maximumf %15, %cst_9 : f32
    %cst_10 = arith.constant 9.99999974E-6 : f32
    %17 = arith.addf %16, %cst_10 : f32
    %18 = math.rsqrt %17 : f32
    %c0_11 = arith.constant 0 : index
    %19 = memref.load %arg4[%c0_11] : memref<1xf32, #tpu.memory_space<smem>>
    %20 = arith.mulf %18, %19 : f32
    %c0_12 = arith.constant 0 : index
    %21 = memref.load %arg5[%c0_12] : memref<1xf32, #tpu.memory_space<smem>>
    %22 = arith.mulf %7, %20 : f32
    %23 = arith.subf %21, %22 : f32
    %24 = vector.broadcast %20 : f32 to vector<2x256xf32>
    %25 = arith.mulf %1, %24 : vector<2x256xf32>
    %26 = vector.broadcast %23 : f32 to vector<2x256xf32>
    %27 = arith.addf %25, %26 : vector<2x256xf32>
    %cst_13 = arith.constant 0.000000e+00 : f32
    %28 = vector.broadcast %cst_13 : f32 to vector<2x256xf32>
    %29 = arith.maximumf %27, %28 : vector<2x256xf32>
    %c0_14 = arith.constant 0 : index
    %c0_15 = arith.constant 0 : index
    %c0_16 = arith.constant 0 : index
    %30 = vector.load %arg6[%c0_14, %c0_15, %c0_16] : memref<1x2x256xf32, #tpu.memory_space<vmem>>, vector<1x2x256xf32>
    %31 = vector.shape_cast %30 : vector<1x2x256xf32> to vector<2x256xf32>
    %32 = vector.shape_cast %29 : vector<2x256xf32> to vector<1x2x256xf32>
    tpu.vector_store %arg6[%c0_14, %c0_15, %c0_16], %32 {strides = array<i32>} : memref<1x2x256xf32, #tpu.memory_space<vmem>>, vector<1x2x256xf32>,
    return
  }
  func.func @transform_0(%arg0: i32) -> (i32, i32, i32) {
    %c0_i32 = arith.constant 0 : i32
    %c0_i32_0 = arith.constant 0 : i32
    %c0_i32_1 = arith.constant 0 : i32
    return %arg0, %c0_i32, %c0_i32_0 : i32, i32, i32
  }
  func.func @transform_1(%arg0: i32) -> (i32, i32) {
    %c0_i32 = arith.constant 0 : i32
    %c0_i32_0 = arith.constant 0 : i32
    %c0_i32_1 = arith.constant 0 : i32
    return %c0_i32, %c0_i32_0 : i32, i32
  }
  func.func @transform_2(%arg0: i32) -> (i32, i32) {
    %c0_i32 = arith.constant 0 : i32
    %c0_i32_0 = arith.constant 0 : i32
    %c0_i32_1 = arith.constant 0 : i32
    return %c0_i32, %c0_i32_0 : i32, i32
  }
  func.func @transform_3(%arg0: i32) -> i32 {
    %c0_i32 = arith.constant 0 : i32
    %c0_i32_0 = arith.constant 0 : i32
    return %c0_i32 : i32
  }
  func.func @transform_4(%arg0: i32) -> i32 {
    %c0_i32 = arith.constant 0 : i32
    %c0_i32_0 = arith.constant 0 : i32
    return %c0_i32 : i32
  }
  func.func @transform_5(%arg0: i32) -> (i32, i32, i32) {
    %c0_i32 = arith.constant 0 : i32
    %c0_i32_0 = arith.constant 0 : i32
    %c0_i32_1 = arith.constant 0 : i32
    return %arg0, %c0_i32, %c0_i32_0 : i32, i32, i32
  }
}

</mosaic_0001>

<llo_original>
// kernel: rnn_encoder2.3
$region0: #{rnn_encoder2.3}
  #allocation0 [shape = 'u32[]', space=smem, size = 0x4, offset = 0x4, fixed_abs, tag = 'smem constant byte address 0x4 - core index']
  #allocation1 [shape = 'u32[144,128]{1,0:T(1,128)}', space=vmem, size = 0x12000, scoped, tag = 'internal scratch']
  #allocation2 [shape = 'f32[1]{0:T(128)S(6)}', space=smem, size = 0x200, scoped, tag = 'scoped memory for rnn_encoder2.3']
  #allocation3 [shape = 'f32[1]{0:T(128)S(6)}', space=smem, size = 0x200, scoped, tag = 'scoped memory for rnn_encoder2.3']
  %s0 = inlined_call_operand.vmem [shape: f32[2,2,256], index: 0, kind: input, shape index: {}]
  %s1 = inlined_call_operand.vmem [shape: f32[16,128], index: 1, kind: input, shape index: {}]
  %s2 = inlined_call_operand.vmem [shape: f32[16,128], index: 2, kind: input, shape index: {}]
  %s3 = inlined_call_operand.<no memory space> [shape: f32[1], index: 3, kind: input, shape index: {}]
  %s4 = inlined_call_operand.<no memory space> [shape: f32[1], index: 4, kind: input, shape index: {}]
  %s5 = inlined_call_operand.vmem [shape: f32[2,2,256], index: 5, kind: output, shape index: {}]
  %s6 = sld [smem:[#allocation0]]
  $region53: #{rnn_encoder2.3} parent=0
    _
  %s8 = ssub.s32 1, %s6
  %s9 = scalar_select 0, %s8, %s6
  %10 = sst [smem:[#allocation2]] %s3
  %11 = sst [smem:[#allocation3]] %s4
  loop: start=0, step=1, limit=4
  $region2: #{rnn_encoder2.3} parent=0 // loop_pre_header
    _
  $region3: #{rnn_encoder2.3} parent=0 // loop_header
    %s13 = sphi 0, %s17
    %p14 = scmp.ge.s32.totalorder %s13, 4
    %s23 = sphi 0, %s25
    %s26 = sphi 0, %s23
    %s27 = sphi 0, %s26
    %s43 = sphi 0, %s27
    %s47 = sphi 0, %s47
    %s49 = sphi 0, %s47
    %s50 = sphi 0, %s49
    %s64 = sphi 0, %s50
    %s68 = sphi 0, %s68
    %s70 = sphi 0, %s68
    %s71 = sphi 0, %s70
    %s85 = sphi 0, %s71
    %s89 = sphi 0, %s89
    %s91 = sphi 0, %s89
    %s92 = sphi 0, %s91
    %s106 = sphi 0, %s92
    %s110 = sphi 0, %s110
    %s112 = sphi 0, %s110
    %s113 = sphi 0, %s112
    %s127 = sphi 0, %s113
    %s133 = sphi 0, %s135
    %s136 = sphi 0, %s133
    %s137 = sphi 0, %s136
    %s153 = sphi 0, %s137
  $region4: #{rnn_encoder2.3} parent=0 // loop_header_branch
    %16 = sbr.rel (%p14) target = $region8
  $region5: #{rnn_encoder2.3} parent=0 // loop_body
    %s18 = ssub.s32 %s13, 1
    %s19 = ssub.s32 %s13, 2
    %s20 = sadd.s32 %s13, 1
    %s21 = ssub.s32 %s13, %s20
    %p22 = scmp.eq.s32.totalorder %s21, 0
    %s24 = sadd.s32 %s23, 1
    %s25 = scalar_select %p22, %s23, %s24
    %p28 = pneg %p22
    %p29 = scmp.eq.s32.totalorder %s13, 1
    %p30 = por %p28, %p29
    %p31 = scmp.ne.s32.totalorder %s23, %s26
    %p32 = scmp.eq.s32.totalorder %s13, 0
    %p33 = por %p31, %p32
    %p34 = scmp.ne.s32.totalorder %s23, %s26
    %p35 = scmp.eq.s32.totalorder %s18, 1
    %p36 = por %p34, %p35
    %p37 = scmp.ne.s32.totalorder %s26, %s27
    %p38 = scmp.eq.s32.totalorder %s18, 0
    %p39 = por %p37, %p38
    %p40 = scmp.ne.s32.totalorder %s26, %s27
    %p41 = scmp.eq.s32.totalorder %s19, 1
    %p42 = por %p40, %p41
    %p44 = scmp.ne.s32.totalorder %s27, %s43
    %p45 = scmp.eq.s32.totalorder %s19, 0
    %p46 = por %p44, %p45
    %s48 = sadd.s32 %s47, 1
    %p51 = scmp.eq.s32.totalorder %s13, 1
    %p52 = scmp.ne.s32.totalorder %s47, %s49
    %p53 = scmp.eq.s32.totalorder %s13, 0
    %p54 = por %p52, %p53
    %p55 = scmp.ne.s32.totalorder %s47, %s49
    %p56 = scmp.eq.s32.totalorder %s18, 1
    %p57 = por %p55, %p56
    %p58 = scmp.ne.s32.totalorder %s49, %s50
    %p59 = scmp.eq.s32.totalorder %s18, 0
    %p60 = por %p58, %p59
    %p61 = scmp.ne.s32.totalorder %s49, %s50
    %p62 = scmp.eq.s32.totalorder %s19, 1
    %p63 = por %p61, %p62
    %p65 = scmp.ne.s32.totalorder %s50, %s64
    %p66 = scmp.eq.s32.totalorder %s19, 0
    %p67 = por %p65, %p66
    %s69 = sadd.s32 %s68, 1
    %p72 = scmp.eq.s32.totalorder %s13, 1
    %p73 = scmp.ne.s32.totalorder %s68, %s70
    %p74 = scmp.eq.s32.totalorder %s13, 0
    %p75 = por %p73, %p74
    %p76 = scmp.ne.s32.totalorder %s68, %s70
    %p77 = scmp.eq.s32.totalorder %s18, 1
    %p78 = por %p76, %p77
    %p79 = scmp.ne.s32.totalorder %s70, %s71
    %p80 = scmp.eq.s32.totalorder %s18, 0
    %p81 = por %p79, %p80
    %p82 = scmp.ne.s32.totalorder %s70, %s71
    %p83 = scmp.eq.s32.totalorder %s19, 1
    %p84 = por %p82, %p83
    %p86 = scmp.ne.s32.totalorder %s71, %s85
    %p87 = scmp.eq.s32.totalorder %s19, 0
    %p88 = por %p86, %p87
    %s90 = sadd.s32 %s89, 1
    %p93 = scmp.eq.s32.totalorder %s13, 1
    %p94 = scmp.ne.s32.totalorder %s89, %s91
    %p95 = scmp.eq.s32.totalorder %s13, 0
    %p96 = por %p94, %p95
    %p97 = scmp.ne.s32.totalorder %s89, %s91
    %p98 = scmp.eq.s32.totalorder %s18, 1
    %p99 = por %p97, %p98
    %p100 = scmp.ne.s32.totalorder %s91, %s92
    %p101 = scmp.eq.s32.totalorder %s18, 0
    %p102 = por %p100, %p101
    %p103 = scmp.ne.s32.totalorder %s91, %s92
    %p104 = scmp.eq.s32.totalorder %s19, 1
    %p105 = por %p103, %p104
    %p107 = scmp.ne.s32.totalorder %s92, %s106
    %p108 = scmp.eq.s32.totalorder %s19, 0
    %p109 = por %p107, %p108
    %s111 = sadd.s32 %s110, 1
    %p114 = scmp.eq.s32.totalorder %s13, 1
    %p115 = scmp.ne.s32.totalorder %s110, %s112
    %p116 = scmp.eq.s32.totalorder %s13, 0
    %p117 = por %p115, %p116
    %p118 = scmp.ne.s32.totalorder %s110, %s112
    %p119 = scmp.eq.s32.totalorder %s18, 1
    %p120 = por %p118, %p119
    %p121 = scmp.ne.s32.totalorder %s112, %s113
    %p122 = scmp.eq.s32.totalorder %s18, 0
    %p123 = por %p121, %p122
    %p124 = scmp.ne.s32.totalorder %s112, %s113
    %p125 = scmp.eq.s32.totalorder %s19, 1
    %p126 = por %p124, %p125
    %p128 = scmp.ne.s32.totalorder %s113, %s127
    %p129 = scmp.eq.s32.totalorder %s19, 0
    %p130 = por %p128, %p129
    %s131 = ssub.s32 %s13, %s20
    %p132 = scmp.eq.s32.totalorder %s131, 0
    %s134 = sadd.s32 %s133, 1
    %s135 = scalar_select %p132, %s133, %s134
    %p138 = pneg %p132
    %p139 = scmp.eq.s32.totalorder %s13, 1
    %p140 = por %p138, %p139
    %p141 = scmp.ne.s32.totalorder %s133, %s136
    %p142 = scmp.eq.s32.totalorder %s13, 0
    %p143 = por %p141, %p142
    %p144 = scmp.ne.s32.totalorder %s133, %s136
    %p145 = scmp.eq.s32.totalorder %s18, 1
    %p146 = por %p144, %p145
    %p147 = scmp.ne.s32.totalorder %s136, %s137
    %p148 = scmp.eq.s32.totalorder %s18, 0
    %p149 = por %p147, %p148
    %p150 = scmp.ne.s32.totalorder %s136, %s137
    %p151 = scmp.eq.s32.totalorder %s19, 1
    %p152 = por %p150, %p151
    %p154 = scmp.ne.s32.totalorder %s137, %s153
    %p155 = scmp.eq.s32.totalorder %s19, 0
    %p156 = por %p154, %p155
    %p157 = scmp.le.s32.totalorder 1, %s13
    %p158 = scmp.lt.s32.totalorder %s13, 3
    %p159 = pnand %p157, %p158
    %p160 = pneg %p159
    // Predicated region
    $region9: #{rnn_encoder2.3} parent=5 // pred_check
      _
    $region10: #{rnn_encoder2.3} parent=5 // pred_check_branch
      %162 = sbr.rel (%p159) target = $region12
    $region11: #{rnn_encoder2.3} parent=5 // pred_region
      %s163 = ssub.s32 %s13, 1
      // Predicated region
      $region13: #{rnn_encoder2.3} parent=11 // pred_check
        %p164 = pneg %p60
      $region14: #{rnn_encoder2.3} parent=11 // pred_check_branch
        %166 = sbr.rel (%p164) target = $region16
      $region15: #{rnn_encoder2.3} parent=11 // pred_region
        _
      $region16: #{rnn_encoder2.3} parent=11 // pred_fallthru
        _
      // Predicated region
      $region17: #{rnn_encoder2.3} parent=11 // pred_check
        %p167 = pneg %p81
      $region18: #{rnn_encoder2.3} parent=11 // pred_check_branch
        %169 = sbr.rel (%p167) target = $region20
      $region19: #{rnn_encoder2.3} parent=11 // pred_region
        _
      $region20: #{rnn_encoder2.3} parent=11 // pred_fallthru
        _
      // Predicated region
      $region21: #{rnn_encoder2.3} parent=11 // pred_check
        %p170 = pneg %p102
      $region22: #{rnn_encoder2.3} parent=11 // pred_check_branch
        %172 = sbr.rel (%p170) target = $region24
      $region23: #{rnn_encoder2.3} parent=11 // pred_region
        _
      $region24: #{rnn_encoder2.3} parent=11 // pred_fallthru
        _
      // Predicated region
      $region25: #{rnn_encoder2.3} parent=11 // pred_check
        %p173 = pneg %p123
      $region26: #{rnn_encoder2.3} parent=11 // pred_check_branch
        %175 = sbr.rel (%p173) target = $region28
      $region27: #{rnn_encoder2.3} parent=11 // pred_region
        _
      $region28: #{rnn_encoder2.3} parent=11 // pred_fallthru
        _
    $region12: #{rnn_encoder2.3} parent=5 // pred_fallthru
      _
    %p176 = scmp.lt.s32.totalorder %s13, 2
    // Predicated region
    $region29: #{rnn_encoder2.3} parent=5 // pred_check
      %p177 = pneg %p176
    $region30: #{rnn_encoder2.3} parent=5 // pred_check_branch
      %179 = sbr.rel (%p177) target = $region32
    $region31: #{rnn_encoder2.3} parent=5 // pred_region
      // Predicated region
      $region33: #{rnn_encoder2.3} parent=31 // pred_check
        %p180 = pneg %p33
      $region34: #{rnn_encoder2.3} parent=31 // pred_check_branch
        %182 = sbr.rel (%p180) target = $region36
      $region35: #{rnn_encoder2.3} parent=31 // pred_region
        %p183 = scmp.lt.s32.totalorder %s13, 1
        %s184 = scalar_select %p183, %s13, 1
        %s185 = smul.addr %s184, 2
        %s186 = smul.addr %s185, 2
        %s187 = scalar_lea.vmem %s0, %s186
      $region36: #{rnn_encoder2.3} parent=31 // pred_fallthru
        _
    $region32: #{rnn_encoder2.3} parent=5 // pred_fallthru
      _
    %p188 = scmp.le.s32.totalorder 1, %s13
    %p189 = scmp.lt.s32.totalorder %s13, 3
    %p190 = pnand %p188, %p189
    %p191 = pneg %p190
    // Predicated region
    $region37: #{rnn_encoder2.3} parent=5 // pred_check
      _
    $region38: #{rnn_encoder2.3} parent=5 // pred_check_branch
      %193 = sbr.rel (%p190) target = $region40
    $region39: #{rnn_encoder2.3} parent=5 // pred_region
      %s194 = ssub.s32 %s13, 1
      %p195 = scmp.lt.s32.totalorder %s18, 1
      %s196 = scalar_select %p195, %s18, 1
      %s197 = smul.addr %s196, 2
      %s198 = smul.addr %s197, 2
      %s199 = scalar_lea.vmem %s0, %s198
      %p200 = pneg %p39
      %p201 = pneg %p36
      %p202 = pneg %p60
      %p203 = pneg %p57
      %p204 = pneg %p81
      %p205 = pneg %p78
      %p206 = pneg %p102
      %p207 = pneg %p99
      %p208 = pneg %p123
      %p209 = pneg %p120
      %p210 = pneg %p149
      %p211 = pneg %p146
      %p212 = scmp.lt.s32.totalorder %s18, 1
      %s213 = scalar_select %p212, %s18, 1
      %s214 = smul.addr %s213, 2
      %s215 = smul.addr %s214, 2
      %s216 = scalar_lea.vmem %s5, %s215
      %p217 = scmp.lt.s32.totalorder %s18, 1
      %s218 = scalar_select %p217, %s18, 1
      %s219 = smul.addr %s218, 2
      %s220 = smul.addr %s219, 2
      %s221 = scalar_lea.vmem %s0, %s220
      %p222 = scmp.lt.s32.totalorder %s18, 1
      %s223 = scalar_select %p222, %s18, 1
      %s224 = smul.addr %s223, 2
      %s225 = smul.addr %s224, 2
      %s226 = scalar_lea.vmem %s5, %s225
      %v227 = vld [vmem:[%s221] sm:$0xf]
      %v228 = vld [vmem:[%s1] sm:$0xff]
      %v229 = vld [vmem:[%s1 + $0x8] sm:$0xff]
      %v230 = vadd.f32 %v228, %v229
      %231 = vadd.xlane.f32.xlu0 %v230
      %v232 = vpop.xlane.xlu0 %231
      %v233 = vrot.slane %v232, 4
      %v234 = vadd.f32 %v232, %v233
      %v235 = vrot.slane %v234, 2
      %v236 = vadd.f32 %v234, %v235
      %v237 = vrot.slane %v236, 1
      %v238 = vadd.f32 %v236, %v237
      %s239 = vtos %v238
      %s240 = smul.f32 %s239, 1.2456154e-06
      %v241 = vld [vmem:[%s2] sm:$0xff]
      %v242 = vld [vmem:[%s2 + $0x8] sm:$0xff]
      %v243 = vadd.f32 %v241, %v242
      %244 = vadd.xlane.f32.xlu0 %v243
      %v245 = vpop.xlane.xlu0 %244
      %v246 = vrot.slane %v245, 4
      %v247 = vadd.f32 %v245, %v246
      %v248 = vrot.slane %v247, 2
      %v249 = vadd.f32 %v247, %v248
      %v250 = vrot.slane %v249, 1
      %v251 = vadd.f32 %v249, %v250
      %s252 = vtos %v251
      %s253 = smul.f32 %s252, 1.2456154e-06
      %s254 = smul.f32 %s240, %s240
      %s255 = ssub.f32 %s253, %s254
      %s256 = smax.f32 %s255, 0.0
      %s257 = sadd.f32 %s256, 1e-05
      %v258 = vstv %s257
      %v259 = vrsqrt.pop %v258
      %s260 = vtos %v259
      %s261 = sld [smem:[#allocation2]]
      %s262 = smul.f32 %s260, %s261
      %s263 = sld [smem:[#allocation3]]
      %s264 = smul.f32 %s240, %s262
      %s265 = ssub.f32 %s263, %s264
      %v266 = vstv %s262
      %v267 = vmul.f32 %v227, %v266
      %v268 = vstv %s265
      %v269 = vadd.f32 %v267, %v268
      %v270 = vmax.f32 %v269, 0.0
      %271 = vst [vmem:[%s226] sm:$0xf] %v270
      %p272 = scmp.lt.s32.totalorder %s18, 1
      %s273 = scalar_select %p272, %s18, 1
      %s274 = smul.addr %s273, 2
      %s275 = smul.addr %s274, 2
      %s276 = scalar_lea.vmem %s5, %s275
      // Predicated region
      $region41: #{rnn_encoder2.3} parent=39 // pred_check
        %p277 = pneg %p146
      $region42: #{rnn_encoder2.3} parent=39 // pred_check_branch
        %279 = sbr.rel (%p277) target = $region44
      $region43: #{rnn_encoder2.3} parent=39 // pred_region
        _
      $region44: #{rnn_encoder2.3} parent=39 // pred_fallthru
        _
    $region40: #{rnn_encoder2.3} parent=5 // pred_fallthru
      _
    %p280 = scmp.le.s32.totalorder 2, %s13
    // Predicated region
    $region45: #{rnn_encoder2.3} parent=5 // pred_check
      %p281 = pneg %p280
    $region46: #{rnn_encoder2.3} parent=5 // pred_check_branch
      %283 = sbr.rel (%p281) target = $region48
    $region47: #{rnn_encoder2.3} parent=5 // pred_region
      %s284 = ssub.s32 %s13, 2
      // Predicated region
      $region49: #{rnn_encoder2.3} parent=47 // pred_check
        %p285 = pneg %p152
      $region50: #{rnn_encoder2.3} parent=47 // pred_check_branch
        %287 = sbr.rel (%p285) target = $region52
      $region51: #{rnn_encoder2.3} parent=47 // pred_region
        %p288 = scmp.lt.s32.totalorder %s19, 1
        %s289 = scalar_select %p288, %s19, 1
        %s290 = smul.addr %s289, 2
        %s291 = smul.addr %s290, 2
        %s292 = scalar_lea.vmem %s5, %s291
      $region52: #{rnn_encoder2.3} parent=47 // pred_fallthru
        _
    $region48: #{rnn_encoder2.3} parent=5 // pred_fallthru
      _
  $region6: #{rnn_encoder2.3} parent=0 // loop_footer
    %s17 = sadd.s32 1, %s13
  $region7: #{rnn_encoder2.3} parent=0 // loop_footer_branch
    %12 = sbr.rel target = $region3
  $region8: #{rnn_encoder2.3} parent=0 // loop_exit
    _

// kernel: rnn_encoder2.2
$region0: #{rnn_encoder2.2}
  #allocation0 [shape = 'u32[]', space=smem, size = 0x4, offset = 0x4, fixed_abs, tag = 'smem constant byte address 0x4 - core index']
  #allocation1 [shape = 'u32[144,128]{1,0:T(1,128)}', space=vmem, size = 0x12000, scoped, tag = 'internal scratch']
  %s0 = inlined_call_operand.vmem [shape: f32[2,8,384], index: 0, kind: input, shape index: {}]
  %s1 = inlined_call_operand.vmem [shape: f32[8,9], index: 1, kind: input, shape index: {}]
  %s2 = inlined_call_operand.vmem [shape: f32[2,2,256], index: 2, kind: output, shape index: {0}]
  %s3 = inlined_call_operand.vmem [shape: f32[16,128], index: 3, kind: output, shape index: {1}]
  %s4 = inlined_call_operand.vmem [shape: f32[16,128], index: 4, kind: output, shape index: {2}]
  %5 = xla_tuple %s2, %s3, %s4
  %s6 = sld [smem:[#allocation0]]
  $region57: #{rnn_encoder2.2} parent=0
    _
  %s8 = ssub.s32 1, %s6
  %s9 = scalar_select 0, %s8, %s6
  loop: start=0, step=1, limit=4
  $region2: #{rnn_encoder2.2} parent=0 // loop_pre_header
    _
  $region3: #{rnn_encoder2.2} parent=0 // loop_header
    %s11 = sphi 0, %s15
    %p12 = scmp.ge.s32.totalorder %s11, 4
    %s21 = sphi 0, %s23
    %s24 = sphi 0, %s21
    %s25 = sphi 0, %s24
    %s41 = sphi 0, %s25
    %s45 = sphi 0, %s45
    %s47 = sphi 0, %s45
    %s48 = sphi 0, %s47
    %s62 = sphi 0, %s48
    %s68 = sphi 0, %s70
    %s71 = sphi 0, %s68
    %s72 = sphi 0, %s71
    %s88 = sphi 0, %s72
    %s94 = sphi 0, %s96
    %s97 = sphi 0, %s94
    %s98 = sphi 0, %s97
    %s114 = sphi 0, %s98
    %s120 = sphi 0, %s122
    %s123 = sphi 0, %s120
    %s124 = sphi 0, %s123
    %s140 = sphi 0, %s124
  $region4: #{rnn_encoder2.2} parent=0 // loop_header_branch
    %14 = sbr.rel (%p12) target = $region8
  $region5: #{rnn_encoder2.2} parent=0 // loop_body
    %s16 = ssub.s32 %s11, 1
    %s17 = ssub.s32 %s11, 2
    %s18 = sadd.s32 %s11, 1
    %s19 = ssub.s32 %s11, %s18
    %p20 = scmp.eq.s32.totalorder %s19, 0
    %s22 = sadd.s32 %s21, 1
    %s23 = scalar_select %p20, %s21, %s22
    %p26 = pneg %p20
    %p27 = scmp.eq.s32.totalorder %s11, 1
    %p28 = por %p26, %p27
    %p29 = scmp.ne.s32.totalorder %s21, %s24
    %p30 = scmp.eq.s32.totalorder %s11, 0
    %p31 = por %p29, %p30
    %p32 = scmp.ne.s32.totalorder %s21, %s24
    %p33 = scmp.eq.s32.totalorder %s16, 1
    %p34 = por %p32, %p33
    %p35 = scmp.ne.s32.totalorder %s24, %s25
    %p36 = scmp.eq.s32.totalorder %s16, 0
    %p37 = por %p35, %p36
    %p38 = scmp.ne.s32.totalorder %s24, %s25
    %p39 = scmp.eq.s32.totalorder %s17, 1
    %p40 = por %p38, %p39
    %p42 = scmp.ne.s32.totalorder %s25, %s41
    %p43 = scmp.eq.s32.totalorder %s17, 0
    %p44 = por %p42, %p43
    %s46 = sadd.s32 %s45, 1
    %p49 = scmp.eq.s32.totalorder %s11, 1
    %p50 = scmp.ne.s32.totalorder %s45, %s47
    %p51 = scmp.eq.s32.totalorder %s11, 0
    %p52 = por %p50, %p51
    %p53 = scmp.ne.s32.totalorder %s45, %s47
    %p54 = scmp.eq.s32.totalorder %s16, 1
    %p55 = por %p53, %p54
    %p56 = scmp.ne.s32.totalorder %s47, %s48
    %p57 = scmp.eq.s32.totalorder %s16, 0
    %p58 = por %p56, %p57
    %p59 = scmp.ne.s32.totalorder %s47, %s48
    %p60 = scmp.eq.s32.totalorder %s17, 1
    %p61 = por %p59, %p60
    %p63 = scmp.ne.s32.totalorder %s48, %s62
    %p64 = scmp.eq.s32.totalorder %s17, 0
    %p65 = por %p63, %p64
    %s66 = ssub.s32 %s11, %s18
    %p67 = scmp.eq.s32.totalorder %s66, 0
    %s69 = sadd.s32 %s68, 1
    %s70 = scalar_select %p67, %s68, %s69
    %p73 = pneg %p67
    %p74 = scmp.eq.s32.totalorder %s11, 1
    %p75 = por %p73, %p74
    %p76 = scmp.ne.s32.totalorder %s68, %s71
    %p77 = scmp.eq.s32.totalorder %s11, 0
    %p78 = por %p76, %p77
    %p79 = scmp.ne.s32.totalorder %s68, %s71
    %p80 = scmp.eq.s32.totalorder %s16, 1
    %p81 = por %p79, %p80
    %p82 = scmp.ne.s32.totalorder %s71, %s72
    %p83 = scmp.eq.s32.totalorder %s16, 0
    %p84 = por %p82, %p83
    %p85 = scmp.ne.s32.totalorder %s71, %s72
    %p86 = scmp.eq.s32.totalorder %s17, 1
    %p87 = por %p85, %p86
    %p89 = scmp.ne.s32.totalorder %s72, %s88
    %p90 = scmp.eq.s32.totalorder %s17, 0
    %p91 = por %p89, %p90
    %s92 = ssub.s32 %s11, %s18
    %p93 = scmp.eq.s32.totalorder %s92, 0
    %s95 = sadd.s32 %s94, 1
    %s96 = scalar_select %p93, %s94, %s95
    %p99 = pneg %p93
    %p100 = scmp.eq.s32.totalorder %s11, 1
    %p101 = por %p99, %p100
    %p102 = scmp.ne.s32.totalorder %s94, %s97
    %p103 = scmp.eq.s32.totalorder %s11, 0
    %p104 = por %p102, %p103
    %p105 = scmp.ne.s32.totalorder %s94, %s97
    %p106 = scmp.eq.s32.totalorder %s16, 1
    %p107 = por %p105, %p106
    %p108 = scmp.ne.s32.totalorder %s97, %s98
    %p109 = scmp.eq.s32.totalorder %s16, 0
    %p110 = por %p108, %p109
    %p111 = scmp.ne.s32.totalorder %s97, %s98
    %p112 = scmp.eq.s32.totalorder %s17, 1
    %p113 = por %p111, %p112
    %p115 = scmp.ne.s32.totalorder %s98, %s114
    %p116 = scmp.eq.s32.totalorder %s17, 0
    %p117 = por %p115, %p116
    %s118 = ssub.s32 %s11, %s18
    %p119 = scmp.eq.s32.totalorder %s118, 0
    %s121 = sadd.s32 %s120, 1
    %s122 = scalar_select %p119, %s120, %s121
    %p125 = pneg %p119
    %p126 = scmp.eq.s32.totalorder %s11, 1
    %p127 = por %p125, %p126
    %p128 = scmp.ne.s32.totalorder %s120, %s123
    %p129 = scmp.eq.s32.totalorder %s11, 0
    %p130 = por %p128, %p129
    %p131 = scmp.ne.s32.totalorder %s120, %s123
    %p132 = scmp.eq.s32.totalorder %s16, 1
    %p133 = por %p131, %p132
    %p134 = scmp.ne.s32.totalorder %s123, %s124
    %p135 = scmp.eq.s32.totalorder %s16, 0
    %p136 = por %p134, %p135
    %p137 = scmp.ne.s32.totalorder %s123, %s124
    %p138 = scmp.eq.s32.totalorder %s17, 1
    %p139 = por %p137, %p138
    %p141 = scmp.ne.s32.totalorder %s124, %s140
    %p142 = scmp.eq.s32.totalorder %s17, 0
    %p143 = por %p141, %p142
    %p144 = scmp.le.s32.totalorder 1, %s11
    %p145 = scmp.lt.s32.totalorder %s11, 3
    %p146 = pnand %p144, %p145
    %p147 = pneg %p146
    // Predicated region
    $region9: #{rnn_encoder2.2} parent=5 // pred_check
      _
    $region10: #{rnn_encoder2.2} parent=5 // pred_check_branch
      %149 = sbr.rel (%p146) target = $region12
    $region11: #{rnn_encoder2.2} parent=5 // pred_region
      %s150 = ssub.s32 %s11, 1
      // Predicated region
      $region13: #{rnn_encoder2.2} parent=11 // pred_check
        %p151 = pneg %p58
      $region14: #{rnn_encoder2.2} parent=11 // pred_check_branch
        %153 = sbr.rel (%p151) target = $region16
      $region15: #{rnn_encoder2.2} parent=11 // pred_region
        _
      $region16: #{rnn_encoder2.2} parent=11 // pred_fallthru
        _
    $region12: #{rnn_encoder2.2} parent=5 // pred_fallthru
      _
    %p154 = scmp.lt.s32.totalorder %s11, 2
    // Predicated region
    $region17: #{rnn_encoder2.2} parent=5 // pred_check
      %p155 = pneg %p154
    $region18: #{rnn_encoder2.2} parent=5 // pred_check_branch
      %157 = sbr.rel (%p155) target = $region20
    $region19: #{rnn_encoder2.2} parent=5 // pred_region
      // Predicated region
      $region21: #{rnn_encoder2.2} parent=19 // pred_check
        %p158 = pneg %p31
      $region22: #{rnn_encoder2.2} parent=19 // pred_check_branch
        %160 = sbr.rel (%p158) target = $region24
      $region23: #{rnn_encoder2.2} parent=19 // pred_region
        %p161 = scmp.lt.s32.totalorder %s11, 1
        %s162 = scalar_select %p161, %s11, 1
        %s163 = smul.addr %s162, 3
        %s164 = smul.addr %s163, 8
        %s165 = scalar_lea.vmem %s0, %s164
      $region24: #{rnn_encoder2.2} parent=19 // pred_fallthru
        _
    $region20: #{rnn_encoder2.2} parent=5 // pred_fallthru
      _
    %p166 = scmp.le.s32.totalorder 1, %s11
    %p167 = scmp.lt.s32.totalorder %s11, 3
    %p168 = pnand %p166, %p167
    %p169 = pneg %p168
    // Predicated region
    $region25: #{rnn_encoder2.2} parent=5 // pred_check
      _
    $region26: #{rnn_encoder2.2} parent=5 // pred_check_branch
      %171 = sbr.rel (%p168) target = $region28
    $region27: #{rnn_encoder2.2} parent=5 // pred_region
      %s172 = ssub.s32 %s11, 1
      %p173 = scmp.lt.s32.totalorder %s16, 1
      %s174 = scalar_select %p173, %s16, 1
      %s175 = smul.addr %s174, 3
      %s176 = smul.addr %s175, 8
      %s177 = scalar_lea.vmem %s0, %s176
      %p178 = pneg %p37
      %p179 = pneg %p34
      %p180 = pneg %p58
      %p181 = pneg %p55
      %p182 = pneg %p84
      %p183 = pneg %p81
      %p184 = scmp.lt.s32.totalorder %s16, 1
      %s185 = scalar_select %p184, %s16, 1
      %s186 = smul.addr %s185, 2
      %s187 = smul.addr %s186, 2
      %s188 = scalar_lea.vmem %s2, %s187
      %p189 = pneg %p110
      %p190 = pneg %p107
      %p191 = scmp.lt.s32.totalorder %s16, 1
      %s192 = scalar_select %p191, %s16, 1
      %s193 = smul.addr %s192, 8
      %s194 = scalar_lea.vmem %s3, %s193
      %p195 = pneg %p136
      %p196 = pneg %p133
      %p197 = scmp.lt.s32.totalorder %s16, 1
      %s198 = scalar_select %p197, %s16, 1
      %s199 = smul.addr %s198, 8
      %s200 = scalar_lea.vmem %s4, %s199
      %p201 = scmp.lt.s32.totalorder %s16, 1
      %s202 = scalar_select %p201, %s16, 1
      %s203 = smul.addr %s202, 3
      %s204 = smul.addr %s203, 8
      %s205 = scalar_lea.vmem %s0, %s204
      %p206 = scmp.lt.s32.totalorder %s16, 1
      %s207 = scalar_select %p206, %s16, 1
      %s208 = smul.addr %s207, 2
      %s209 = smul.addr %s208, 2
      %s210 = scalar_lea.vmem %s2, %s209
      %p211 = scmp.lt.s32.totalorder %s16, 1
      %s212 = scalar_select %p211, %s16, 1
      %s213 = smul.addr %s212, 8
      %s214 = scalar_lea.vmem %s3, %s213
      %p215 = scmp.lt.s32.totalorder %s16, 1
      %s216 = scalar_select %p215, %s16, 1
      %s217 = smul.addr %s216, 8
      %s218 = scalar_lea.vmem %s4, %s217
      %v219 = vld [vmem:[%s205] sm:$0xff]
      %v220 = vld [vmem:[%s205 + $0x8] sm:$0xff]
      %v221 = vld [vmem:[%s205 + $0x10] sm:$0xff]
      %v222 = vld [vmem:[%s1] sm:$0xff]
      %224 = vset.pattern.permute.xlu0 0
      %225 = vperm.xlu0 %224, %v222
      %v226 = vpop.permute.xlu0 %225
      %v228 = vmul.f32 %v219, %v226
      %v229 = vmul.f32 %v220, %v226
      %230 = vset.pattern.permute.xlu0 3
      %231 = vperm.xlu0 %230, %v222
      %v232 = vpop.permute.xlu0 %231
      %v234 = vmul.f32 %v219, %v232
      %v235 = vmul.f32 %v220, %v232
      %v236 = vmul.f32 %v221, %v232
      %240 = vrot.lane.b32.xlu0 %v234, 112
      %v241 = vpop.permute.xlu0 %240
      %242 = vrot.lane.b32.xlu0 %v235, 112
      %v243 = vpop.permute.xlu0 %242
      %244 = vrot.lane.b32.xlu0 %v236, 112
      %v245 = vpop.permute.xlu0 %244
      %vm246 = vcmask 916480
      %v247 = vsel %vm246, %v241, %v243
      %v248 = vsel %vm246, %v243, %v245
      %v251 = vadd.f32 %v228, %v247
      %v252 = vadd.f32 %v229, %v248
      %253 = vset.pattern.permute.xlu0 6
      %254 = vperm.xlu0 %253, %v222
      %v255 = vpop.permute.xlu0 %254
      %v257 = vmul.f32 %v219, %v255
      %v258 = vmul.f32 %v220, %v255
      %v259 = vmul.f32 %v221, %v255
      %263 = vrot.lane.b32.xlu0 %v257, 96
      %v264 = vpop.permute.xlu0 %263
      %265 = vrot.lane.b32.xlu0 %v258, 96
      %v266 = vpop.permute.xlu0 %265
      %267 = vrot.lane.b32.xlu0 %v259, 96
      %v268 = vpop.permute.xlu0 %267
      %vm269 = vcmask 785408
      %v270 = vsel %vm269, %v264, %v266
      %v271 = vsel %vm269, %v266, %v268
      %v274 = vadd.f32 %v251, %v270
      %v275 = vadd.f32 %v252, %v271
      %276 = vset.pattern.permute.xlu0 1
      %277 = vperm.xlu0 %276, %v222
      %v278 = vpop.permute.xlu0 %277
      %v280 = vmul.f32 %v219, %v278
      %v281 = vmul.f32 %v220, %v278
      %v282 = vmul.f32 %v221, %v278
      %283 = vset.pattern.permute.xlu0 4
      %284 = vperm.xlu0 %283, %v222
      %v285 = vpop.permute.xlu0 %284
      %v287 = vmul.f32 %v219, %v285
      %v288 = vmul.f32 %v220, %v285
      %v289 = vmul.f32 %v221, %v285
      %293 = vrot.lane.b32.xlu0 %v287, 112
      %v294 = vpop.permute.xlu0 %293
      %295 = vrot.lane.b32.xlu0 %v288, 112
      %v296 = vpop.permute.xlu0 %295
      %297 = vrot.lane.b32.xlu0 %v289, 112
      %v298 = vpop.permute.xlu0 %297
      %v299 = vsel %vm246, %v294, %v296
      %v300 = vsel %vm246, %v296, %v298
      %v304 = vadd.f32 %v280, %v299
      %v305 = vadd.f32 %v281, %v300
      %v306 = vadd.f32 %v282, %v298
      %307 = vset.pattern.permute.xlu0 7
      %308 = vperm.xlu0 %307, %v222
      %v309 = vpop.permute.xlu0 %308
      %v311 = vmul.f32 %v219, %v309
      %v312 = vmul.f32 %v220, %v309
      %v313 = vmul.f32 %v221, %v309
      %317 = vrot.lane.b32.xlu0 %v311, 96
      %v318 = vpop.permute.xlu0 %317
      %319 = vrot.lane.b32.xlu0 %v312, 96
      %v320 = vpop.permute.xlu0 %319
      %321 = vrot.lane.b32.xlu0 %v313, 96
      %v322 = vpop.permute.xlu0 %321
      %v323 = vsel %vm269, %v318, %v320
      %v324 = vsel %vm269, %v320, %v322
      %v328 = vadd.f32 %v304, %v323
      %v329 = vadd.f32 %v305, %v324
      %v330 = vadd.f32 %v306, %v322
      %334 = vrot.lane.b32.xlu0 %v328, 127
      %v335 = vpop.permute.xlu0 %334
      %336 = vrot.lane.b32.xlu0 %v329, 127
      %v337 = vpop.permute.xlu0 %336
      %338 = vrot.lane.b32.xlu0 %v330, 127
      %v339 = vpop.permute.xlu0 %338
      %vm340 = vcmask 1039360
      %v341 = vsel %vm340, %v335, %v337
      %v342 = vsel %vm340, %v337, %v339
      %v345 = vadd.f32 %v274, %v341
      %v346 = vadd.f32 %v275, %v342
      %347 = vset.pattern.permute.xlu0 2
      %348 = vperm.xlu0 %347, %v222
      %v349 = vpop.permute.xlu0 %348
      %v351 = vmul.f32 %v219, %v349
      %v352 = vmul.f32 %v220, %v349
      %v353 = vmul.f32 %v221, %v349
      %354 = vset.pattern.permute.xlu0 5
      %355 = vperm.xlu0 %354, %v222
      %v356 = vpop.permute.xlu0 %355
      %v358 = vmul.f32 %v219, %v356
      %v359 = vmul.f32 %v220, %v356
      %v360 = vmul.f32 %v221, %v356
      %364 = vrot.lane.b32.xlu0 %v358, 112
      %v365 = vpop.permute.xlu0 %364
      %366 = vrot.lane.b32.xlu0 %v359, 112
      %v367 = vpop.permute.xlu0 %366
      %368 = vrot.lane.b32.xlu0 %v360, 112
      %v369 = vpop.permute.xlu0 %368
      %v370 = vsel %vm246, %v365, %v367
      %v371 = vsel %vm246, %v367, %v369
      %v375 = vadd.f32 %v351, %v370
      %v376 = vadd.f32 %v352, %v371
      %v377 = vadd.f32 %v353, %v369
      %378 = vset.pattern.permute.xlu0 8
      %379 = vperm.xlu0 %378, %v222
      %v380 = vpop.permute.xlu0 %379
      %v382 = vmul.f32 %v219, %v380
      %v383 = vmul.f32 %v220, %v380
      %v384 = vmul.f32 %v221, %v380
      %388 = vrot.lane.b32.xlu0 %v382, 96
      %v389 = vpop.permute.xlu0 %388
      %390 = vrot.lane.b32.xlu0 %v383, 96
      %v391 = vpop.permute.xlu0 %390
      %392 = vrot.lane.b32.xlu0 %v384, 96
      %v393 = vpop.permute.xlu0 %392
      %v394 = vsel %vm269, %v389, %v391
      %v395 = vsel %vm269, %v391, %v393
      %v399 = vadd.f32 %v375, %v394
      %v400 = vadd.f32 %v376, %v395
      %v401 = vadd.f32 %v377, %v393
      %405 = vrot.lane.b32.xlu0 %v399, 126
      %v406 = vpop.permute.xlu0 %405
      %407 = vrot.lane.b32.xlu0 %v400, 126
      %v408 = vpop.permute.xlu0 %407
      %409 = vrot.lane.b32.xlu0 %v401, 126
      %v410 = vpop.permute.xlu0 %409
      %vm411 = vcmask 1031168
      %v412 = vsel %vm411, %v406, %v408
      %v413 = vsel %vm411, %v408, %v410
      %v416 = vadd.f32 %v345, %v412
      %v417 = vadd.f32 %v346, %v413
      %vm418 = vcmask 1043456
      %v419 = vsel %vm418, %v416, 0.0
      %v420 = vrot.slane %v419, 4
      %v421 = vadd.f32 %v419, %v420
      %v422 = vrot.slane %v421, 2
      %v423 = vadd.f32 %v421, %v422
      %v424 = vrot.slane %v423, 1
      %v425 = vadd.f32 %v423, %v424
      %v426 = vsel %vm418, %v417, 0.0
      %v427 = vrot.slane %v426, 4
      %v428 = vadd.f32 %v426, %v427
      %v429 = vrot.slane %v428, 2
      %v430 = vadd.f32 %v428, %v429
      %v431 = vrot.slane %v430, 1
      %v432 = vadd.f32 %v430, %v431
      %v435 = vrot.slane %v416, 4
      %v436 = vrot.slane %v417, 4
      %v439 = vsel %vm418, %v435, 0.0
      %v440 = vrot.slane %v439, 4
      %v441 = vadd.f32 %v439, %v440
      %v442 = vrot.slane %v441, 2
      %v443 = vadd.f32 %v441, %v442
      %v444 = vrot.slane %v443, 1
      %v445 = vadd.f32 %v443, %v444
      %v446 = vsel %vm418, %v436, 0.0
      %v447 = vrot.slane %v446, 4
      %v448 = vadd.f32 %v446, %v447
      %v449 = vrot.slane %v448, 2
      %v450 = vadd.f32 %v448, %v449
      %v451 = vrot.slane %v450, 1
      %v452 = vadd.f32 %v450, %v451
      %vm453 = vcmask 1040384
      %v454 = vsel %vm453, %v425, %v445
      %v455 = vsel %vm453, %v432, %v452
      %v458 = vcombine.low %v454, %v455
      %v460 = vunpack.c.l.s4 1983009808
      %v461 = vunpack.c.0.s8 %v460
      %v462 = vlaneseq
      %v463 = vshrl.u32 %v462, 7
      %v464 = vsub.s32 %v461, %v463
      %v465 = vrot.slane %v458, %v464
      %467 = vst [vmem:[%s210] sm:$0xf] %v465
      %v468 = vlaneseq
      %v469 = vand.u32 %v468, 127
      %v470 = vadd.s32 %v469, 128
      %v471 = vshra.s32 %v469, 4
      %v472 = vshra.s32 %v470, 4
      %v473 = vand.u32 %v469, 15
      %v474 = vand.u32 %v470, 15
      %vm475 = vcmp.lt.s32.totalorder %v471, 14
      %vm476 = vcmp.lt.s32.totalorder %v472, 14
      %vm477 = vcmp.lt.s32.totalorder %v473, 14
      %vm478 = vcmp.lt.s32.totalorder %v474, 14
      %vm479 = vmand %vm475, %vm477
      %vm480 = vmand %vm476, %vm478
      %v481 = vsel %vm479, %v454, 0.0
      %v482 = vsel %vm480, %v455, 0.0
      %vm483 = vcmask 1041408
      %v484 = vsel %vm483, %v481, 0.0
      %v485 = vsel %vm483, %v482, 0.0
      %v486 = vadd.f32 %v484, %v485
      %487 = vadd.xlane.f32.xlu0 %v486
      %v488 = vpop.xlane.xlu0 %487
      %v489 = vrot.slane %v488, 4
      %v490 = vadd.f32 %v488, %v489
      %v491 = vrot.slane %v490, 2
      %v492 = vadd.f32 %v490, %v491
      %v493 = vrot.slane %v492, 1
      %v494 = vadd.f32 %v492, %v493
      %s495 = vtos %v494
      %v496 = vstv %s495
      %497 = vst [vmem:[%s214] sm:$0xff] %v496
      %v498 = vmul.f32 %v481, %v481
      %v499 = vmul.f32 %v482, %v482
      %v500 = vsel %vm483, %v498, 0.0
      %v501 = vsel %vm483, %v499, 0.0
      %v502 = vadd.f32 %v500, %v501
      %503 = vadd.xlane.f32.xlu0 %v502
      %v504 = vpop.xlane.xlu0 %503
      %v505 = vrot.slane %v504, 4
      %v506 = vadd.f32 %v504, %v505
      %v507 = vrot.slane %v506, 2
      %v508 = vadd.f32 %v506, %v507
      %v509 = vrot.slane %v508, 1
      %v510 = vadd.f32 %v508, %v509
      %s511 = vtos %v510
      %v512 = vstv %s511
      %513 = vst [vmem:[%s218] sm:$0xff] %v512
      %p514 = scmp.lt.s32.totalorder %s16, 1
      %s515 = scalar_select %p514, %s16, 1
      %s516 = smul.addr %s515, 2
      %s517 = smul.addr %s516, 2
      %s518 = scalar_lea.vmem %s2, %s517
      %p519 = scmp.lt.s32.totalorder %s16, 1
      %s520 = scalar_select %p519, %s16, 1
      %s521 = smul.addr %s520, 8
      %s522 = scalar_lea.vmem %s3, %s521
      %p523 = scmp.lt.s32.totalorder %s16, 1
      %s524 = scalar_select %p523, %s16, 1
      %s525 = smul.addr %s524, 8
      %s526 = scalar_lea.vmem %s4, %s525
      // Predicated region
      $region29: #{rnn_encoder2.2} parent=27 // pred_check
        %p527 = pneg %p81
      $region30: #{rnn_encoder2.2} parent=27 // pred_check_branch
        %529 = sbr.rel (%p527) target = $region32
      $region31: #{rnn_encoder2.2} parent=27 // pred_region
        _
      $region32: #{rnn_encoder2.2} parent=27 // pred_fallthru
        _
      // Predicated region
      $region33: #{rnn_encoder2.2} parent=27 // pred_check
        %p530 = pneg %p107
      $region34: #{rnn_encoder2.2} parent=27 // pred_check_branch
        %532 = sbr.rel (%p530) target = $region36
      $region35: #{rnn_encoder2.2} parent=27 // pred_region
        _
      $region36: #{rnn_encoder2.2} parent=27 // pred_fallthru
        _
      // Predicated region
      $region37: #{rnn_encoder2.2} parent=27 // pred_check
        %p533 = pneg %p133
      $region38: #{rnn_encoder2.2} parent=27 // pred_check_branch
        %535 = sbr.rel (%p533) target = $region40
      $region39: #{rnn_encoder2.2} parent=27 // pred_region
        _
      $region40: #{rnn_encoder2.2} parent=27 // pred_fallthru
        _
    $region28: #{rnn_encoder2.2} parent=5 // pred_fallthru
      _
    %p536 = scmp.le.s32.totalorder 2, %s11
    // Predicated region
    $region41: #{rnn_encoder2.2} parent=5 // pred_check
      %p537 = pneg %p536
    $region42: #{rnn_encoder2.2} parent=5 // pred_check_branch
      %539 = sbr.rel (%p537) target = $region44
    $region43: #{rnn_encoder2.2} parent=5 // pred_region
      %s540 = ssub.s32 %s11, 2
      // Predicated region
      $region45: #{rnn_encoder2.2} parent=43 // pred_check
        %p541 = pneg %p87
      $region46: #{rnn_encoder2.2} parent=43 // pred_check_branch
        %543 = sbr.rel (%p541) target = $region48
      $region47: #{rnn_encoder2.2} parent=43 // pred_region
        %p544 = scmp.lt.s32.totalorder %s17, 1
        %s545 = scalar_select %p544, %s17, 1
        %s546 = smul.addr %s545, 2
        %s547 = smul.addr %s546, 2
        %s548 = scalar_lea.vmem %s2, %s547
      $region48: #{rnn_encoder2.2} parent=43 // pred_fallthru
        _
      // Predicated region
      $region49: #{rnn_encoder2.2} parent=43 // pred_check
        %p549 = pneg %p113
      $region50: #{rnn_encoder2.2} parent=43 // pred_check_branch
        %551 = sbr.rel (%p549) target = $region52
      $region51: #{rnn_encoder2.2} parent=43 // pred_region
        %p552 = scmp.lt.s32.totalorder %s17, 1
        %s553 = scalar_select %p552, %s17, 1
        %s554 = smul.addr %s553, 8
        %s555 = scalar_lea.vmem %s3, %s554
      $region52: #{rnn_encoder2.2} parent=43 // pred_fallthru
        _
      // Predicated region
      $region53: #{rnn_encoder2.2} parent=43 // pred_check
        %p556 = pneg %p139
      $region54: #{rnn_encoder2.2} parent=43 // pred_check_branch
        %558 = sbr.rel (%p556) target = $region56
      $region55: #{rnn_encoder2.2} parent=43 // pred_region
        %p559 = scmp.lt.s32.totalorder %s17, 1
        %s560 = scalar_select %p559, %s17, 1
        %s561 = smul.addr %s560, 8
        %s562 = scalar_lea.vmem %s4, %s561
      $region56: #{rnn_encoder2.2} parent=43 // pred_fallthru
        _
    $region44: #{rnn_encoder2.2} parent=5 // pred_fallthru
      _
  $region6: #{rnn_encoder2.2} parent=0 // loop_footer
    %s15 = sadd.s32 1, %s11
  $region7: #{rnn_encoder2.2} parent=0 // loop_footer_branch
    %10 = sbr.rel target = $region3
  $region8: #{rnn_encoder2.2} parent=0 // loop_exit
    _

</llo_original>
